<compile_context>
chip_gen: v7x
topology: tpu7x:2x2x1
jax: 0.10.0
libtpu: 0.0.40
codegen_flags: <defaults>
</compile_context>

<pallas_src>
import jax
import jax.numpy as jnp
from jax.experimental import pallas as pl
from jax.experimental.pallas import tpu as pltpu  # noqa: F401  (TPU backend assumed)

INPUT_DIM = 12  # matches the PyTorch script's `input_dim`


# =============================== Pallas kernel ================================

def _attention_layer_kernel(x_ref, w_ref, o_ref):
    """Fused forward:
        scores  = x @ w^T                      # nn.Linear(D, 1, bias=False)
        weights = softmax(scores, dim=1)       # over the sequence axis
        out     = sum_T(x * weights)           # (B, D)
    """
    x = x_ref[...]                                   # (B, T, D)  f32, VMEM-resident
    w = w_ref[...]                                   # (1, 1, D)

    # --- scores: tiny-K contraction kept on the VPU (broadcast-mul + lane reduce)
    s = jnp.sum(x * w, axis=-1, keepdims=True)       # (B, T, 1)

    # --- numerically-stable softmax over the sequence axis (torch dim=1)
    m = jnp.max(s, axis=1, keepdims=True)            # (B, 1, 1)  sublane reduce (XLU)
    e = jnp.exp(s - m)                               # EUP
    denom = jnp.sum(e, axis=1, keepdims=True)        # (B, 1, 1)
    p = e * pl.reciprocal(denom, approx=True)        # EUP reciprocal (free slot)

    # --- attention-weighted sum over the sequence axis
    o_ref[...] = jnp.sum(x * p, axis=1)              # (B, D)


# ================================ wrapper =====================================

def attention_layer(x, w):
    """x: (B, T, D) float32; w: (1, D) == nn.Linear(D, 1, bias=False).weight."""
    B, T, D = x.shape
    return pl.pallas_call(
        _attention_layer_kernel,
        # No grid, default whole-array VMEM blocks: single launch, fully resident.
        out_shape=jax.ShapeDtypeStruct((B, D), jnp.float32),
    )(x.astype(jnp.float32), w.reshape(1, 1, D).astype(jnp.float32))


def attention_layer_ref(x, w):
    """Pure-JAX reference (mirrors the PyTorch module exactly)."""
    s = jnp.einsum("btd,d->bt", x, w.reshape(-1))    # Linear(D, 1, bias=False)
    p = jax.nn.softmax(s, axis=1)                    # softmax over dim=1 (seq)
    return jnp.einsum("btd,bt->bd", x, p)            # sum(x * weights, dim=1)


# ================================== main ======================================

if __name__ == "__main__":
    key = jax.random.PRNGKey(0)
    kx, kw = jax.random.split(key)

    B, T, D = 2, 16, INPUT_DIM                       # small shapes consistent w/ module
    x = jax.random.normal(kx, (B, T, D), jnp.float32)
    # nn.Linear(input_dim, 1, bias=False).weight has shape (1, input_dim)
    w = (jax.random.normal(kw, (1, D), jnp.float32) / jnp.sqrt(D)).astype(jnp.float32)

    out = jax.jit(attention_layer)(x, w)
    jax.block_until_ready(out)

    ref = attention_layer_ref(x, w)
    assert out.shape == (B, D)
    assert bool(jnp.all(jnp.isfinite(out)))
    assert bool(jnp.allclose(out, ref, rtol=2e-3, atol=2e-3)), \
        f"max abs err = {float(jnp.max(jnp.abs(out - ref)))}"
    print("KERNEL_OK")
</pallas_src>

<mosaic_0001>
module attributes {stable_mosaic.version = 11 : i64} {
  func.func @_attention_layer_kernel(%arg0: memref<2x16x12xf32, #tpu.memory_space<vmem>>, %arg1: memref<1x1x12xf32, #tpu.memory_space<vmem>>, %arg2: memref<2x12xf32, #tpu.memory_space<vmem>>) attributes {dimension_semantics = [], scalar_prefetch = 0 : i64, scratch_operands = 0 : i64, tpu.core_type = #tpu.core_type<tc>} {
    %c0 = arith.constant 0 : index
    %c0_0 = arith.constant 0 : index
    %c0_1 = arith.constant 0 : index
    %0 = vector.load %arg0[%c0, %c0_0, %c0_1] : memref<2x16x12xf32, #tpu.memory_space<vmem>>, vector<2x16x12xf32>
    %c0_2 = arith.constant 0 : index
    %c0_3 = arith.constant 0 : index
    %c0_4 = arith.constant 0 : index
    %1 = vector.load %arg1[%c0_2, %c0_3, %c0_4] : memref<1x1x12xf32, #tpu.memory_space<vmem>>, vector<1x1x12xf32>
    %2 = vector.broadcast %1 : vector<1x1x12xf32> to vector<2x16x12xf32>
    %3 = arith.mulf %0, %2 : vector<2x16x12xf32>
    %cst = arith.constant dense<0.000000e+00> : vector<2x16xf32>
    %4 = vector.multi_reduction <add>, %3, %cst [2] : vector<2x16x12xf32> to vector<2x16xf32>
    %5 = vector.shape_cast %4 : vector<2x16xf32> to vector<2x16x1xf32>
    %cst_5 = arith.constant dense<0xFF800000> : vector<2x1xf32>
    %6 = vector.multi_reduction <maximumf>, %5, %cst_5 [1] : vector<2x16x1xf32> to vector<2x1xf32>
    %7 = vector.shape_cast %6 : vector<2x1xf32> to vector<2x1x1xf32>
    %8 = vector.broadcast %7 : vector<2x1x1xf32> to vector<2x16x1xf32>
    %9 = arith.subf %5, %8 : vector<2x16x1xf32>
    %10 = math.exp %9 : vector<2x16x1xf32>
    %cst_6 = arith.constant dense<0.000000e+00> : vector<2x1xf32>
    %11 = vector.multi_reduction <add>, %10, %cst_6 [1] : vector<2x16x1xf32> to vector<2x1xf32>
    %12 = vector.shape_cast %11 : vector<2x1xf32> to vector<2x1x1xf32>
    %13 = tpu.reciprocal %12 {approx = true} : vector<2x1x1xf32> -> vector<2x1x1xf32>
    %14 = vector.broadcast %13 : vector<2x1x1xf32> to vector<2x16x1xf32>
    %15 = arith.mulf %10, %14 : vector<2x16x1xf32>
    %16 = vector.broadcast %15 : vector<2x16x1xf32> to vector<2x16x12xf32>
    %17 = arith.mulf %0, %16 : vector<2x16x12xf32>
    %cst_7 = arith.constant dense<0.000000e+00> : vector<2x12xf32>
    %18 = vector.multi_reduction <add>, %17, %cst_7 [1] : vector<2x16x12xf32> to vector<2x12xf32>
    %c0_8 = arith.constant 0 : index
    %c0_9 = arith.constant 0 : index
    %19 = vector.load %arg2[%c0_8, %c0_9] : memref<2x12xf32, #tpu.memory_space<vmem>>, vector<2x12xf32>
    tpu.vector_store %arg2[%c0_8, %c0_9], %18 {strides = array<i32>} : memref<2x12xf32, #tpu.memory_space<vmem>>, vector<2x12xf32>,
    return
  }
}

</mosaic_0001>

<llo_original>
// kernel: attention_layer.1
$region0: #{attention_layer.1}
  #allocation0 [shape = 'u32[]', space=smem, size = 0x4, offset = 0x4, fixed_abs, tag = 'smem constant byte address 0x4 - core index']
  #allocation1 [shape = 'u32[144,128]{1,0:T(1,128)}', space=vmem, size = 0x12000, scoped, tag = 'internal scratch']
  %s0 = inlined_call_operand.vmem [shape: f32[2,16,12], index: 0, kind: input, shape index: {}]
  %s1 = inlined_call_operand.vmem [shape: f32[1,1,12], index: 1, kind: input, shape index: {}]
  %s2 = inlined_call_operand.hbm [shape: f32[2,12], index: 2, kind: output, shape index: {}]
  %s3 = sld [smem:[#allocation0]]
  $region18: #{attention_layer.1} parent=0
    _
  %s5 = ssub.s32 1, %s3
  %s6 = scalar_select 0, %s5, %s3
  $region1: #{attention_layer.1} parent=0
    #allocation2 [shape = 'u8[1024]{0}', space=vmem, size = 0x400, scoped, tag = 'output window, operand 0, single buffered']
    #allocation3 [shape = 's32[1]{0}', space=sflag, size = 0x4, scoped, tag = 'scoped memory for attention_layer.1']
    %7 = vsyncpa [#allocation3], 0
    // Predicated region
    $region2: #{attention_layer.1} parent=1 // pred_check
      _
    $region3: #{attention_layer.1} parent=1 // pred_check_branch
      %9 = sbr.rel (0) target = $region5
    $region4: #{attention_layer.1} parent=1 // pred_region
      _
    $region5: #{attention_layer.1} parent=1 // pred_fallthru
      _
    // Predicated region
    $region6: #{attention_layer.1} parent=1 // pred_check
      _
    $region7: #{attention_layer.1} parent=1 // pred_check_branch
      %11 = sbr.rel (0) target = $region9
    $region8: #{attention_layer.1} parent=1 // pred_region
      _
    $region9: #{attention_layer.1} parent=1 // pred_fallthru
      _
    %v12 = vld [vmem:[%s0] sm:$0xff]
    %v13 = vld [vmem:[%s0 + $0x8] sm:$0xff]
    %v14 = vld [vmem:[%s0 + $0x10] sm:$0xff]
    %v15 = vld [vmem:[%s0 + $0x18] sm:$0xff]
    %v16 = vld [vmem:[%s1] sm:$0x1]
    %v18 = vlaneseq
    %v19 = vshrl.u32 %v18, 7
    %v20 = vsub.s32 0, %v19
    %v21 = vrot.slane %v16, %v20
    %v23 = vmul.f32 %v12, %v21
    %v24 = vmul.f32 %v13, %v21
    %v25 = vmul.f32 %v14, %v21
    %v26 = vmul.f32 %v15, %v21
    %vm27 = vcmask 97280
    %v28 = vsel %vm27, %v23, 0.0
    %29 = vadd.xlane.f32.xlu0 %v28
    %v30 = vpop.xlane.xlu0 %29
    %v31 = vsel %vm27, %v24, 0.0
    %32 = vadd.xlane.f32.xlu0 %v31
    %v33 = vpop.xlane.xlu0 %32
    %v34 = vsel %vm27, %v25, 0.0
    %35 = vadd.xlane.f32.xlu0 %v34
    %v36 = vpop.xlane.xlu0 %35
    %v37 = vsel %vm27, %v26, 0.0
    %38 = vadd.xlane.f32.xlu0 %v37
    %v39 = vpop.xlane.xlu0 %38
    %v40 = vmax.f32 %v30, %v33
    %v41 = vrot.slane %v40, 4
    %v42 = vmax.f32 %v40, %v41
    %v43 = vrot.slane %v42, 2
    %v44 = vmax.f32 %v42, %v43
    %v45 = vrot.slane %v44, 1
    %v46 = vmax.f32 %v44, %v45
    %v47 = vmax.f32 %v36, %v39
    %v48 = vrot.slane %v47, 4
    %v49 = vmax.f32 %v47, %v48
    %v50 = vrot.slane %v49, 2
    %v51 = vmax.f32 %v49, %v50
    %v52 = vrot.slane %v51, 1
    %v53 = vmax.f32 %v51, %v52
    %v54 = vsub.f32 %v30, %v46
    %v55 = vsub.f32 %v33, %v46
    %v56 = vsub.f32 %v36, %v53
    %v57 = vsub.f32 %v39, %v53
    %v58 = vmul.f32 %v54, 1.442695
    %v59 = vpow.pop %v58
    %v60 = vmul.f32 %v55, 1.442695
    %v61 = vpow.pop %v60
    %v62 = vmul.f32 %v56, 1.442695
    %v63 = vpow.pop %v62
    %v64 = vmul.f32 %v57, 1.442695
    %v65 = vpow.pop %v64
    %v66 = vadd.f32 %v59, %v61
    %v67 = vrot.slane %v66, 4
    %v68 = vadd.f32 %v66, %v67
    %v69 = vrot.slane %v68, 2
    %v70 = vadd.f32 %v68, %v69
    %v71 = vrot.slane %v70, 1
    %v72 = vadd.f32 %v70, %v71
    %v73 = vadd.f32 %v63, %v65
    %v74 = vrot.slane %v73, 4
    %v75 = vadd.f32 %v73, %v74
    %v76 = vrot.slane %v75, 2
    %v77 = vadd.f32 %v75, %v76
    %v78 = vrot.slane %v77, 1
    %v79 = vadd.f32 %v77, %v78
    %v80 = vrcp.pop %v72
    %v81 = vrcp.pop %v79
    %v82 = vmul.f32 %v59, %v80
    %v83 = vmul.f32 %v61, %v80
    %v84 = vmul.f32 %v63, %v81
    %v85 = vmul.f32 %v65, %v81
    %v86 = vmul.f32 %v12, %v82
    %v87 = vmul.f32 %v13, %v83
    %v88 = vmul.f32 %v14, %v84
    %v89 = vmul.f32 %v15, %v85
    %v90 = vsel %vm27, %v86, 0.0
    %v91 = vsel %vm27, %v87, 0.0
    %v92 = vadd.f32 %v90, %v91
    %v93 = vrot.slane %v92, 4
    %v94 = vadd.f32 %v92, %v93
    %v95 = vrot.slane %v94, 2
    %v96 = vadd.f32 %v94, %v95
    %v97 = vrot.slane %v96, 1
    %v98 = vadd.f32 %v96, %v97
    %v99 = vsel %vm27, %v88, 0.0
    %v100 = vsel %vm27, %v89, 0.0
    %v101 = vadd.f32 %v99, %v100
    %v102 = vrot.slane %v101, 4
    %v103 = vadd.f32 %v101, %v102
    %v104 = vrot.slane %v103, 2
    %v105 = vadd.f32 %v103, %v104
    %v106 = vrot.slane %v105, 1
    %v107 = vadd.f32 %v105, %v106
    %vm110 = vcmask 1041409
    %v111 = vsel %vm110, %v107, %v98
    %vm113 = vcmask 91136
    %114 = vst.msk [vmem:[#allocation2] sm:$0x3] %vm113, %v111
    // Predicated region
    $region10: #{attention_layer.1} parent=1 // pred_check
      _
    $region11: #{attention_layer.1} parent=1 // pred_check_branch
      %116 = sbr.rel (0) target = $region13
    $region12: #{attention_layer.1} parent=1 // pred_region
      %s118 = ssub.s32 32, 32
      %119 = vsyncadd [#allocation3], %s118
      %s121 = sshll.u32 [#allocation2], 4
      %s122 = int_to_ptr.vmem [resolvable:$true] %s121
      %124 = dma.vmem_to_hbm [thread:$0]  %s122, 32, %s2, [#allocation3]
    $region13: #{attention_layer.1} parent=1 // pred_fallthru
      _
    // Predicated region
    $region14: #{attention_layer.1} parent=1 // pred_check
      _
    $region15: #{attention_layer.1} parent=1 // pred_check_branch
      %126 = sbr.rel (0) target = $region17
    $region16: #{attention_layer.1} parent=1 // pred_region
      %127 = dma.done [#allocation3], 32
    $region17: #{attention_layer.1} parent=1 // pred_fallthru
      _
    %128 = vsyncpa [#allocation3], 1

</llo_original>
